<compile_context>
chip_gen: v7x
topology: tpu7x:2x2x1
jax: 0.10.0
libtpu: 0.0.40
codegen_flags: <defaults>
</compile_context>

<pallas_src>
import jax
import jax.numpy as jnp
from jax.experimental import pallas as pl
from jax.experimental.pallas import tpu as pltpu

# ---- synthetic QVModel hyper-parameters (small, deterministic) --------------
NUM_SPARSE_TYPES = 64
NUM_SPARSE = 8            # active sparse features per sample
NUM_NUMERIC = 6
NUM_PROG_TYPES = 32
NUM_PROG = 8
NUM_ACTION_TYPES = 32
NUM_CANDIDATES = 8        # C  (MAX_NUM_ACTION_CANDIDATES analogue)
DIM = 32                  # D  embedding / model width
HIDDEN = 64               # H  encoder MLP hidden width
NUM_TOKENS = NUM_SPARSE + 1 + NUM_PROG + NUM_CANDIDATES   # T = 25

BATCH_TILE = 32           # per grid step -> matmul M / output lanes = 32*8 = 256


# ---- Pallas kernel: both QVModels' folded Q heads + torch.minimum, fused -----
def _qmodel_kernel(biasq_ref,                  # SMEM (2,) f32 folded biases
                   x1_ref, x2_ref,             # VMEM (D, Mt) bf16 candidate slabs
                   w1a_ref, b1a_ref, w2qa_ref, # (H,D) bf16, (H,1) f32, (H,1) f32
                   w1b_ref, b1b_ref, w2qb_ref,
                   q_ref):                     # VMEM (1, Mt) f32, lane-dense
    # model 1: h = relu(W1^T x + b1); q = sum_h(h * w2q) + bias_q
    h1 = jnp.maximum(
        jnp.dot(w1a_ref[...], x1_ref[...],
                preferred_element_type=jnp.float32) + b1a_ref[...], 0.0)
    q1 = jnp.sum(h1 * w2qa_ref[...], axis=0, keepdims=True) + biasq_ref[0]
    # model 2
    h2 = jnp.maximum(
        jnp.dot(w1b_ref[...], x2_ref[...],
                preferred_element_type=jnp.float32) + b1b_ref[...], 0.0)
    q2 = jnp.sum(h2 * w2qb_ref[...], axis=0, keepdims=True) + biasq_ref[1]
    # QModel.forward: torch.minimum(q1, q2)
    q_ref[...] = jnp.minimum(q1, q2)


# ---- parameter construction & embedding glue (plain JAX) ---------------------
def make_params(key, scale=0.1):
    ks = jax.random.split(key, 9)
    return {
        "emb_sparse": jax.random.normal(ks[0], (NUM_SPARSE_TYPES, DIM), jnp.float32) * scale,
        "w_numeric": jax.random.normal(ks[1], (NUM_NUMERIC, DIM), jnp.float32) * scale,
        "emb_prog": jax.random.normal(ks[2], (NUM_PROG_TYPES, DIM), jnp.float32) * scale,
        "emb_cand": jax.random.normal(ks[3], (NUM_ACTION_TYPES, DIM), jnp.float32) * scale,
        "w1": jax.random.normal(ks[4], (DIM, HIDDEN), jnp.float32) * scale,
        "b1": jax.random.normal(ks[5], (1, HIDDEN), jnp.float32) * scale,
        "w2": jax.random.normal(ks[6], (HIDDEN, DIM), jnp.float32) * scale,
        "b2": jax.random.normal(ks[7], (1, DIM), jnp.float32) * scale,
        "wq": jax.random.normal(ks[8], (DIM, 1), jnp.float32) * scale,
        "bq": jnp.zeros((1, 1), jnp.float32),
    }


def embed_tokens(params, sparse, numeric, progression, candidates):
    # glue: embedding gathers + token concatenation (not the hot path)
    sp = params["emb_sparse"][sparse]                              # (B, 8, D)
    nu = (numeric @ params["w_numeric"])[:, None, :]               # (B, 1, D)
    pr = params["emb_prog"][progression]                           # (B, 8, D)
    ca = params["emb_cand"][candidates]                            # (B, C, D)
    return jnp.concatenate([sp, nu, pr, ca], axis=1)               # (B, T, D)


def _prep_candidate_slab(params, sparse, numeric, progression, candidates):
    """Wrapper-side layout plumbing: (cand_emb + ctx) as feature-major bf16."""
    x = embed_tokens(params, sparse, numeric, progression, candidates)  # (B,T,D) f32
    ctx = jnp.mean(x, axis=1, keepdims=True)                            # (B,1,D)
    xc = x[:, NUM_TOKENS - NUM_CANDIDATES:, :] + ctx                    # (B,C,D)
    xc_flat = xc.reshape(-1, DIM)                                       # (B*C, D)
    return xc_flat.T.astype(jnp.bfloat16)                               # (D, B*C) bf16


def _fold_head(params):
    """Exact algebraic fold of the Q head: q = relu(xW1+b1) @ (W2 Wq) + (b2 Wq + bq)."""
    w2q = params["w2"] @ params["wq"]                                   # (H, 1) f32
    bias_q = (params["b2"] @ params["wq"] + params["bq"]).reshape(())   # scalar f32
    w1T = params["w1"].T.astype(jnp.bfloat16)                           # (H, D) bf16
    b1T = params["b1"].T                                                # (H, 1) f32
    return w1T, b1T, w2q, bias_q


# ---- wrapper calling the Pallas kernel ---------------------------------------
def q_model(params1, params2, sparse, numeric, progression, candidates,
            *, batch_tile=BATCH_TILE):
    B = sparse.shape[0]
    assert B % batch_tile == 0
    m_total = B * NUM_CANDIDATES
    m_tile = batch_tile * NUM_CANDIDATES            # 256 lanes per step

    x1t = _prep_candidate_slab(params1, sparse, numeric, progression, candidates)
    x2t = _prep_candidate_slab(params2, sparse, numeric, progression, candidates)
    w1a, b1a, w2qa, bqa = _fold_head(params1)
    w1b, b1b, w2qb, bqb = _fold_head(params2)
    bias_both = jnp.stack([bqa, bqb]).astype(jnp.float32)               # (2,)

    tile_map = lambda i: (0, i)
    rep_map = lambda i: (0, 0)

    x_spec = pl.BlockSpec((DIM, m_tile), tile_map)
    w1_spec = pl.BlockSpec((HIDDEN, DIM), rep_map)
    b1_spec = pl.BlockSpec((HIDDEN, 1), rep_map)
    w2q_spec = pl.BlockSpec((HIDDEN, 1), rep_map)
    bias_spec = pl.BlockSpec(memory_space=pltpu.MemorySpace.SMEM)

    q_flat = pl.pallas_call(
        _qmodel_kernel,
        out_shape=jax.ShapeDtypeStruct((1, m_total), jnp.float32),
        grid=(B // batch_tile,),
        in_specs=[bias_spec,
                  x_spec, x_spec,
                  w1_spec, b1_spec, w2q_spec,
                  w1_spec, b1_spec, w2q_spec],
        out_specs=pl.BlockSpec((1, m_tile), tile_map),
        compiler_params=pltpu.CompilerParams(
            dimension_semantics=("parallel",),
            vmem_limit_bytes=32 * 1024 * 1024),
    )(bias_both, x1t, x2t, w1a, b1a, w2qa, w1b, b1b, w2qb)

    return q_flat.reshape(B, NUM_CANDIDATES)


# ---- pure-JAX reference (unfolded, full f32) ---------------------------------
def _qv_q_ref(x, w1, b1, w2, b2, wq, bq):
    bt = x.shape[0]
    ctx = jnp.mean(x, axis=1, keepdims=True)
    xc = x[:, NUM_TOKENS - NUM_CANDIDATES:, :] + ctx
    xc2 = xc.reshape(bt * NUM_CANDIDATES, DIM)
    h = jnp.maximum(xc2 @ w1 + b1, 0.0)
    e = h @ w2 + b2
    q = e @ wq
    return q.reshape(bt, NUM_CANDIDATES) + bq


def q_model_ref(params1, params2, sparse, numeric, progression, candidates):
    x1 = embed_tokens(params1, sparse, numeric, progression, candidates)
    x2 = embed_tokens(params2, sparse, numeric, progression, candidates)
    q1 = _qv_q_ref(x1, params1["w1"], params1["b1"], params1["w2"],
                   params1["b2"], params1["wq"], params1["bq"])
    q2 = _qv_q_ref(x2, params2["w1"], params2["b1"], params2["w2"],
                   params2["b2"], params2["wq"], params2["bq"])
    return jnp.minimum(q1, q2)


if __name__ == "__main__":
    key = jax.random.PRNGKey(0)
    k_p1, k_p2, k_sp, k_nu, k_pr, k_ca = jax.random.split(key, 6)

    B = 128   # 4 grid steps of batch_tile=32 -> M tile = 256
    params1 = make_params(k_p1)
    params2 = make_params(k_p2)
    sparse = jax.random.randint(k_sp, (B, NUM_SPARSE), 0, NUM_SPARSE_TYPES,
                                dtype=jnp.int32)
    numeric = jax.random.normal(k_nu, (B, NUM_NUMERIC), jnp.float32)
    progression = jax.random.randint(k_pr, (B, NUM_PROG), 0, NUM_PROG_TYPES,
                                     dtype=jnp.int32)
    candidates = jax.random.randint(k_ca, (B, NUM_CANDIDATES), 0,
                                    NUM_ACTION_TYPES, dtype=jnp.int32)

    q_fn = jax.jit(q_model)
    q = q_fn(params1, params2, sparse, numeric, progression, candidates)
    q = jax.block_until_ready(q)

    q_ref = q_model_ref(params1, params2, sparse, numeric, progression,
                        candidates)
    assert q.shape == (B, NUM_CANDIDATES)
    assert q.dtype == jnp.float32
    # bf16 matmul operands in the kernel -> loosened tolerance vs f32 reference
    assert jnp.allclose(q, q_ref, atol=1e-2, rtol=1e-2), (
        float(jnp.max(jnp.abs(q - q_ref))))
    print("KERNEL_OK")
</pallas_src>

<mosaic_0001>
module attributes {stable_mosaic.version = 11 : i64} {
  func.func @_qmodel_kernel(%arg0: i32, %arg1: memref<2xf32, #tpu.memory_space<smem>>, %arg2: memref<32x256xbf16, #tpu.memory_space<vmem>>, %arg3: memref<32x256xbf16, #tpu.memory_space<vmem>>, %arg4: memref<64x32xbf16, #tpu.memory_space<vmem>>, %arg5: memref<64x1xf32, #tpu.memory_space<vmem>>, %arg6: memref<64x1xf32, #tpu.memory_space<vmem>>, %arg7: memref<64x32xbf16, #tpu.memory_space<vmem>>, %arg8: memref<64x1xf32, #tpu.memory_space<vmem>>, %arg9: memref<64x1xf32, #tpu.memory_space<vmem>>, %arg10: memref<1x256xf32, #tpu.memory_space<vmem>>) attributes {dimension_semantics = [#tpu.dimension_semantics<parallel>], iteration_bounds = array<i64: 4>, scalar_prefetch = 0 : i64, scratch_operands = 0 : i64, tpu.core_type = #tpu.core_type<tc>, window_params = [{transform_indices = @transform_0, window_bounds = array<i64: 2>}, {transform_indices = @transform_1, window_bounds = array<i64: 32, 256>}, {transform_indices = @transform_2, window_bounds = array<i64: 32, 256>}, {pipeline_mode = #tpu.pipeline_mode<synchronous>, transform_indices = @transform_3, window_bounds = array<i64: 64, 32>}, {pipeline_mode = #tpu.pipeline_mode<synchronous>, transform_indices = @transform_4, window_bounds = array<i64: 64, 1>}, {pipeline_mode = #tpu.pipeline_mode<synchronous>, transform_indices = @transform_5, window_bounds = array<i64: 64, 1>}, {pipeline_mode = #tpu.pipeline_mode<synchronous>, transform_indices = @transform_6, window_bounds = array<i64: 64, 32>}, {pipeline_mode = #tpu.pipeline_mode<synchronous>, transform_indices = @transform_7, window_bounds = array<i64: 64, 1>}, {pipeline_mode = #tpu.pipeline_mode<synchronous>, transform_indices = @transform_8, window_bounds = array<i64: 64, 1>}, {transform_indices = @transform_9, window_bounds = array<i64: 1, 256>}]} {
    %c0 = arith.constant 0 : index
    %c0_0 = arith.constant 0 : index
    %0 = vector.load %arg4[%c0, %c0_0] : memref<64x32xbf16, #tpu.memory_space<vmem>>, vector<64x32xbf16>
    %c0_1 = arith.constant 0 : index
    %c0_2 = arith.constant 0 : index
    %1 = vector.load %arg2[%c0_1, %c0_2] : memref<32x256xbf16, #tpu.memory_space<vmem>>, vector<32x256xbf16>
    %cst = arith.constant dense<0.000000e+00> : vector<64x256xf32>
    %2 = tpu.matmul %0, %1, %cst {dimension_numbers = #tpu.dot_dimension_numbers<[1], [0], [0], [1], [0, 0, 1, 1], [], []>} : vector<64x32xbf16>, vector<32x256xbf16>, vector<64x256xf32> -> vector<64x256xf32>
    %c0_3 = arith.constant 0 : index
    %c0_4 = arith.constant 0 : index
    %3 = vector.load %arg5[%c0_3, %c0_4] : memref<64x1xf32, #tpu.memory_space<vmem>>, vector<64x1xf32>
    %4 = vector.broadcast %3 : vector<64x1xf32> to vector<64x256xf32>
    %5 = arith.addf %2, %4 : vector<64x256xf32>
    %cst_5 = arith.constant 0.000000e+00 : f32
    %6 = vector.broadcast %cst_5 : f32 to vector<64x256xf32>
    %7 = arith.maximumf %5, %6 : vector<64x256xf32>
    %c0_6 = arith.constant 0 : index
    %c0_7 = arith.constant 0 : index
    %8 = vector.load %arg6[%c0_6, %c0_7] : memref<64x1xf32, #tpu.memory_space<vmem>>, vector<64x1xf32>
    %9 = vector.broadcast %8 : vector<64x1xf32> to vector<64x256xf32>
    %10 = arith.mulf %7, %9 : vector<64x256xf32>
    %cst_8 = arith.constant dense<0.000000e+00> : vector<256xf32>
    %11 = vector.multi_reduction <add>, %10, %cst_8 [0] : vector<64x256xf32> to vector<256xf32>
    %12 = vector.shape_cast %11 : vector<256xf32> to vector<1x256xf32>
    %c0_9 = arith.constant 0 : index
    %13 = memref.load %arg1[%c0_9] : memref<2xf32, #tpu.memory_space<smem>>
    %14 = vector.broadcast %13 : f32 to vector<1x256xf32>
    %15 = arith.addf %12, %14 : vector<1x256xf32>
    %c0_10 = arith.constant 0 : index
    %c0_11 = arith.constant 0 : index
    %16 = vector.load %arg7[%c0_10, %c0_11] : memref<64x32xbf16, #tpu.memory_space<vmem>>, vector<64x32xbf16>
    %c0_12 = arith.constant 0 : index
    %c0_13 = arith.constant 0 : index
    %17 = vector.load %arg3[%c0_12, %c0_13] : memref<32x256xbf16, #tpu.memory_space<vmem>>, vector<32x256xbf16>
    %cst_14 = arith.constant dense<0.000000e+00> : vector<64x256xf32>
    %18 = tpu.matmul %16, %17, %cst_14 {dimension_numbers = #tpu.dot_dimension_numbers<[1], [0], [0], [1], [0, 0, 1, 1], [], []>} : vector<64x32xbf16>, vector<32x256xbf16>, vector<64x256xf32> -> vector<64x256xf32>
    %c0_15 = arith.constant 0 : index
    %c0_16 = arith.constant 0 : index
    %19 = vector.load %arg8[%c0_15, %c0_16] : memref<64x1xf32, #tpu.memory_space<vmem>>, vector<64x1xf32>
    %20 = vector.broadcast %19 : vector<64x1xf32> to vector<64x256xf32>
    %21 = arith.addf %18, %20 : vector<64x256xf32>
    %cst_17 = arith.constant 0.000000e+00 : f32
    %22 = vector.broadcast %cst_17 : f32 to vector<64x256xf32>
    %23 = arith.maximumf %21, %22 : vector<64x256xf32>
    %c0_18 = arith.constant 0 : index
    %c0_19 = arith.constant 0 : index
    %24 = vector.load %arg9[%c0_18, %c0_19] : memref<64x1xf32, #tpu.memory_space<vmem>>, vector<64x1xf32>
    %25 = vector.broadcast %24 : vector<64x1xf32> to vector<64x256xf32>
    %26 = arith.mulf %23, %25 : vector<64x256xf32>
    %cst_20 = arith.constant dense<0.000000e+00> : vector<256xf32>
    %27 = vector.multi_reduction <add>, %26, %cst_20 [0] : vector<64x256xf32> to vector<256xf32>
    %28 = vector.shape_cast %27 : vector<256xf32> to vector<1x256xf32>
    %c1 = arith.constant 1 : index
    %29 = memref.load %arg1[%c1] : memref<2xf32, #tpu.memory_space<smem>>
    %30 = vector.broadcast %29 : f32 to vector<1x256xf32>
    %31 = arith.addf %28, %30 : vector<1x256xf32>
    %32 = arith.minimumf %15, %31 : vector<1x256xf32>
    %c0_21 = arith.constant 0 : index
    %c0_22 = arith.constant 0 : index
    %33 = vector.load %arg10[%c0_21, %c0_22] : memref<1x256xf32, #tpu.memory_space<vmem>>, vector<1x256xf32>
    tpu.vector_store %arg10[%c0_21, %c0_22], %32 {strides = array<i32>} : memref<1x256xf32, #tpu.memory_space<vmem>>, vector<1x256xf32>,
    return
  }
  func.func @transform_0(%arg0: i32) -> i32 {
    %c0_i32 = arith.constant 0 : i32
    %c0_i32_0 = arith.constant 0 : i32
    return %c0_i32 : i32
  }
  func.func @transform_1(%arg0: i32) -> (i32, i32) {
    %c0_i32 = arith.constant 0 : i32
    %c0_i32_0 = arith.constant 0 : i32
    return %c0_i32, %arg0 : i32, i32
  }
  func.func @transform_2(%arg0: i32) -> (i32, i32) {
    %c0_i32 = arith.constant 0 : i32
    %c0_i32_0 = arith.constant 0 : i32
    return %c0_i32, %arg0 : i32, i32
  }
  func.func @transform_3(%arg0: i32) -> (i32, i32) {
    %c0_i32 = arith.constant 0 : i32
    %c0_i32_0 = arith.constant 0 : i32
    %c0_i32_1 = arith.constant 0 : i32
    return %c0_i32, %c0_i32_0 : i32, i32
  }
  func.func @transform_4(%arg0: i32) -> (i32, i32) {
    %c0_i32 = arith.constant 0 : i32
    %c0_i32_0 = arith.constant 0 : i32
    %c0_i32_1 = arith.constant 0 : i32
    return %c0_i32, %c0_i32_0 : i32, i32
  }
  func.func @transform_5(%arg0: i32) -> (i32, i32) {
    %c0_i32 = arith.constant 0 : i32
    %c0_i32_0 = arith.constant 0 : i32
    %c0_i32_1 = arith.constant 0 : i32
    return %c0_i32, %c0_i32_0 : i32, i32
  }
  func.func @transform_6(%arg0: i32) -> (i32, i32) {
    %c0_i32 = arith.constant 0 : i32
    %c0_i32_0 = arith.constant 0 : i32
    %c0_i32_1 = arith.constant 0 : i32
    return %c0_i32, %c0_i32_0 : i32, i32
  }
  func.func @transform_7(%arg0: i32) -> (i32, i32) {
    %c0_i32 = arith.constant 0 : i32
    %c0_i32_0 = arith.constant 0 : i32
    %c0_i32_1 = arith.constant 0 : i32
    return %c0_i32, %c0_i32_0 : i32, i32
  }
  func.func @transform_8(%arg0: i32) -> (i32, i32) {
    %c0_i32 = arith.constant 0 : i32
    %c0_i32_0 = arith.constant 0 : i32
    %c0_i32_1 = arith.constant 0 : i32
    return %c0_i32, %c0_i32_0 : i32, i32
  }
  func.func @transform_9(%arg0: i32) -> (i32, i32) {
    %c0_i32 = arith.constant 0 : i32
    %c0_i32_0 = arith.constant 0 : i32
    return %c0_i32, %arg0 : i32, i32
  }
}

</mosaic_0001>

<llo_original>
// kernel: q_model.1
$region0: #{q_model.1}
  #allocation0 [shape = 'u32[]', space=smem, size = 0x4, offset = 0x4, fixed_abs, tag = 'smem constant byte address 0x4 - core index']
  #allocation1 [shape = 'u32[144,128]{1,0:T(1,128)}', space=vmem, size = 0x12000, scoped, tag = 'internal scratch']
  %s0 = inlined_call_operand.vmem [shape: f32[2], index: 0, kind: input, shape index: {}]
  %s1 = inlined_call_operand.vmem [shape: bf16[32,1024], index: 1, kind: input, shape index: {}]
  %s2 = inlined_call_operand.vmem [shape: bf16[32,1024], index: 2, kind: input, shape index: {}]
  %s3 = inlined_call_operand.vmem [shape: bf16[64,32], index: 3, kind: input, shape index: {}]
  %s4 = inlined_call_operand.vmem [shape: f32[64,1], index: 4, kind: input, shape index: {}]
  %s5 = inlined_call_operand.vmem [shape: f32[64,1], index: 5, kind: input, shape index: {}]
  %s6 = inlined_call_operand.vmem [shape: bf16[64,32], index: 6, kind: input, shape index: {}]
  %s7 = inlined_call_operand.vmem [shape: f32[64,1], index: 7, kind: input, shape index: {}]
  %s8 = inlined_call_operand.vmem [shape: f32[64,1], index: 8, kind: input, shape index: {}]
  %s9 = inlined_call_operand.vmem [shape: f32[1,1024], index: 9, kind: output, shape index: {}]
  %s10 = sld [smem:[#allocation0]]
  $region149: #{q_model.1} parent=0
    _
  %s12 = ssub.s32 1, %s10
  %s13 = scalar_select 0, %s12, %s10
  $region1: #{q_model.1} parent=0
    #allocation2 [shape = 'u8[512]{0}', space=smem, size = 0x200, scoped, tag = 'input window, operand 0, single buffered']
    #allocation3 [shape = 's32[2]{0}', space=sflag, size = 0x8, scoped, tag = 'scoped memory for q_model.1']
    #allocation4 [shape = 'u8[32768]{0}', space=vmem, size = 0x8000, scoped, tag = 'input window, operand 1']
    #allocation5 [shape = 'u8[32768]{0}', space=vmem, size = 0x8000, scoped, tag = 'input window, operand 2']
    %14 = vsyncpa [#allocation3], 0
    loop: start=0, step=1, limit=6
    $region2: #{q_model.1} parent=1 // loop_pre_header
      _
    $region3: #{q_model.1} parent=1 // loop_header
      %s16 = sphi 0, %s20
      %p17 = scmp.ge.s32.totalorder %s16, 6
      %s24 = sphi 0, %s24
      %s26 = sphi 0, %s24
      %s27 = sphi 0, %s26
      %s41 = sphi 0, %s27
      %s47 = sphi 0, %s49
      %s50 = sphi 0, %s47
      %s51 = sphi 0, %s50
      %s67 = sphi 0, %s51
      %s73 = sphi 0, %s75
      %s76 = sphi 0, %s73
      %s77 = sphi 0, %s76
      %s93 = sphi 0, %s77
      %s97 = sphi 0, %s97
      %s99 = sphi 0, %s97
      %s100 = sphi 0, %s99
      %s114 = sphi 0, %s100
      %s118 = sphi 0, %s118
      %s120 = sphi 0, %s118
      %s121 = sphi 0, %s120
      %s135 = sphi 0, %s121
      %s139 = sphi 0, %s139
      %s141 = sphi 0, %s139
      %s142 = sphi 0, %s141
      %s156 = sphi 0, %s142
      %s160 = sphi 0, %s160
      %s162 = sphi 0, %s160
      %s163 = sphi 0, %s162
      %s177 = sphi 0, %s163
      %s181 = sphi 0, %s181
      %s183 = sphi 0, %s181
      %s184 = sphi 0, %s183
      %s198 = sphi 0, %s184
      %s202 = sphi 0, %s202
      %s204 = sphi 0, %s202
      %s205 = sphi 0, %s204
      %s219 = sphi 0, %s205
      %s225 = sphi 0, %s227
      %s228 = sphi 0, %s225
      %s229 = sphi 0, %s228
      %s245 = sphi 0, %s229
    $region4: #{q_model.1} parent=1 // loop_header_branch
      %19 = sbr.rel (%p17) target = $region8
    $region5: #{q_model.1} parent=1 // loop_body
      %s21 = ssub.s32 %s16, 1
      %s22 = ssub.s32 %s16, 2
      %s23 = sadd.s32 %s16, 1
      %s25 = sadd.s32 %s24, 1
      %p28 = scmp.eq.s32.totalorder %s16, 3
      %p29 = scmp.ne.s32.totalorder %s24, %s26
      %p30 = scmp.eq.s32.totalorder %s16, 0
      %p31 = por %p29, %p30
      %p32 = scmp.ne.s32.totalorder %s24, %s26
      %p33 = scmp.eq.s32.totalorder %s21, 3
      %p34 = por %p32, %p33
      %p35 = scmp.ne.s32.totalorder %s26, %s27
      %p36 = scmp.eq.s32.totalorder %s21, 0
      %p37 = por %p35, %p36
      %p38 = scmp.ne.s32.totalorder %s26, %s27
      %p39 = scmp.eq.s32.totalorder %s22, 3
      %p40 = por %p38, %p39
      %p42 = scmp.ne.s32.totalorder %s27, %s41
      %p43 = scmp.eq.s32.totalorder %s22, 0
      %p44 = por %p42, %p43
      %s45 = ssub.s32 %s16, %s23
      %p46 = scmp.eq.s32.totalorder %s45, 0
      %s48 = sadd.s32 %s47, 1
      %s49 = scalar_select %p46, %s47, %s48
      %p52 = pneg %p46
      %p53 = scmp.eq.s32.totalorder %s16, 3
      %p54 = por %p52, %p53
      %p55 = scmp.ne.s32.totalorder %s47, %s50
      %p56 = scmp.eq.s32.totalorder %s16, 0
      %p57 = por %p55, %p56
      %p58 = scmp.ne.s32.totalorder %s47, %s50
      %p59 = scmp.eq.s32.totalorder %s21, 3
      %p60 = por %p58, %p59
      %p61 = scmp.ne.s32.totalorder %s50, %s51
      %p62 = scmp.eq.s32.totalorder %s21, 0
      %p63 = por %p61, %p62
      %p64 = scmp.ne.s32.totalorder %s50, %s51
      %p65 = scmp.eq.s32.totalorder %s22, 3
      %p66 = por %p64, %p65
      %p68 = scmp.ne.s32.totalorder %s51, %s67
      %p69 = scmp.eq.s32.totalorder %s22, 0
      %p70 = por %p68, %p69
      %s71 = ssub.s32 %s16, %s23
      %p72 = scmp.eq.s32.totalorder %s71, 0
      %s74 = sadd.s32 %s73, 1
      %s75 = scalar_select %p72, %s73, %s74
      %p78 = pneg %p72
      %p79 = scmp.eq.s32.totalorder %s16, 3
      %p80 = por %p78, %p79
      %p81 = scmp.ne.s32.totalorder %s73, %s76
      %p82 = scmp.eq.s32.totalorder %s16, 0
      %p83 = por %p81, %p82
      %p84 = scmp.ne.s32.totalorder %s73, %s76
      %p85 = scmp.eq.s32.totalorder %s21, 3
      %p86 = por %p84, %p85
      %p87 = scmp.ne.s32.totalorder %s76, %s77
      %p88 = scmp.eq.s32.totalorder %s21, 0
      %p89 = por %p87, %p88
      %p90 = scmp.ne.s32.totalorder %s76, %s77
      %p91 = scmp.eq.s32.totalorder %s22, 3
      %p92 = por %p90, %p91
      %p94 = scmp.ne.s32.totalorder %s77, %s93
      %p95 = scmp.eq.s32.totalorder %s22, 0
      %p96 = por %p94, %p95
      %s98 = sadd.s32 %s97, 1
      %p101 = scmp.eq.s32.totalorder %s16, 3
      %p102 = scmp.ne.s32.totalorder %s97, %s99
      %p103 = scmp.eq.s32.totalorder %s16, 0
      %p104 = por %p102, %p103
      %p105 = scmp.ne.s32.totalorder %s97, %s99
      %p106 = scmp.eq.s32.totalorder %s21, 3
      %p107 = por %p105, %p106
      %p108 = scmp.ne.s32.totalorder %s99, %s100
      %p109 = scmp.eq.s32.totalorder %s21, 0
      %p110 = por %p108, %p109
      %p111 = scmp.ne.s32.totalorder %s99, %s100
      %p112 = scmp.eq.s32.totalorder %s22, 3
      %p113 = por %p111, %p112
      %p115 = scmp.ne.s32.totalorder %s100, %s114
      %p116 = scmp.eq.s32.totalorder %s22, 0
      %p117 = por %p115, %p116
      %s119 = sadd.s32 %s118, 1
      %p122 = scmp.eq.s32.totalorder %s16, 3
      %p123 = scmp.ne.s32.totalorder %s118, %s120
      %p124 = scmp.eq.s32.totalorder %s16, 0
      %p125 = por %p123, %p124
      %p126 = scmp.ne.s32.totalorder %s118, %s120
      %p127 = scmp.eq.s32.totalorder %s21, 3
      %p128 = por %p126, %p127
      %p129 = scmp.ne.s32.totalorder %s120, %s121
      %p130 = scmp.eq.s32.totalorder %s21, 0
      %p131 = por %p129, %p130
      %p132 = scmp.ne.s32.totalorder %s120, %s121
      %p133 = scmp.eq.s32.totalorder %s22, 3
      %p134 = por %p132, %p133
      %p136 = scmp.ne.s32.totalorder %s121, %s135
      %p137 = scmp.eq.s32.totalorder %s22, 0
      %p138 = por %p136, %p137
      %s140 = sadd.s32 %s139, 1
      %p143 = scmp.eq.s32.totalorder %s16, 3
      %p144 = scmp.ne.s32.totalorder %s139, %s141
      %p145 = scmp.eq.s32.totalorder %s16, 0
      %p146 = por %p144, %p145
      %p147 = scmp.ne.s32.totalorder %s139, %s141
      %p148 = scmp.eq.s32.totalorder %s21, 3
      %p149 = por %p147, %p148
      %p150 = scmp.ne.s32.totalorder %s141, %s142
      %p151 = scmp.eq.s32.totalorder %s21, 0
      %p152 = por %p150, %p151
      %p153 = scmp.ne.s32.totalorder %s141, %s142
      %p154 = scmp.eq.s32.totalorder %s22, 3
      %p155 = por %p153, %p154
      %p157 = scmp.ne.s32.totalorder %s142, %s156
      %p158 = scmp.eq.s32.totalorder %s22, 0
      %p159 = por %p157, %p158
      %s161 = sadd.s32 %s160, 1
      %p164 = scmp.eq.s32.totalorder %s16, 3
      %p165 = scmp.ne.s32.totalorder %s160, %s162
      %p166 = scmp.eq.s32.totalorder %s16, 0
      %p167 = por %p165, %p166
      %p168 = scmp.ne.s32.totalorder %s160, %s162
      %p169 = scmp.eq.s32.totalorder %s21, 3
      %p170 = por %p168, %p169
      %p171 = scmp.ne.s32.totalorder %s162, %s163
      %p172 = scmp.eq.s32.totalorder %s21, 0
      %p173 = por %p171, %p172
      %p174 = scmp.ne.s32.totalorder %s162, %s163
      %p175 = scmp.eq.s32.totalorder %s22, 3
      %p176 = por %p174, %p175
      %p178 = scmp.ne.s32.totalorder %s163, %s177
      %p179 = scmp.eq.s32.totalorder %s22, 0
      %p180 = por %p178, %p179
      %s182 = sadd.s32 %s181, 1
      %p185 = scmp.eq.s32.totalorder %s16, 3
      %p186 = scmp.ne.s32.totalorder %s181, %s183
      %p187 = scmp.eq.s32.totalorder %s16, 0
      %p188 = por %p186, %p187
      %p189 = scmp.ne.s32.totalorder %s181, %s183
      %p190 = scmp.eq.s32.totalorder %s21, 3
      %p191 = por %p189, %p190
      %p192 = scmp.ne.s32.totalorder %s183, %s184
      %p193 = scmp.eq.s32.totalorder %s21, 0
      %p194 = por %p192, %p193
      %p195 = scmp.ne.s32.totalorder %s183, %s184
      %p196 = scmp.eq.s32.totalorder %s22, 3
      %p197 = por %p195, %p196
      %p199 = scmp.ne.s32.totalorder %s184, %s198
      %p200 = scmp.eq.s32.totalorder %s22, 0
      %p201 = por %p199, %p200
      %s203 = sadd.s32 %s202, 1
      %p206 = scmp.eq.s32.totalorder %s16, 3
      %p207 = scmp.ne.s32.totalorder %s202, %s204
      %p208 = scmp.eq.s32.totalorder %s16, 0
      %p209 = por %p207, %p208
      %p210 = scmp.ne.s32.totalorder %s202, %s204
      %p211 = scmp.eq.s32.totalorder %s21, 3
      %p212 = por %p210, %p211
      %p213 = scmp.ne.s32.totalorder %s204, %s205
      %p214 = scmp.eq.s32.totalorder %s21, 0
      %p215 = por %p213, %p214
      %p216 = scmp.ne.s32.totalorder %s204, %s205
      %p217 = scmp.eq.s32.totalorder %s22, 3
      %p218 = por %p216, %p217
      %p220 = scmp.ne.s32.totalorder %s205, %s219
      %p221 = scmp.eq.s32.totalorder %s22, 0
      %p222 = por %p220, %p221
      %s223 = ssub.s32 %s16, %s23
      %p224 = scmp.eq.s32.totalorder %s223, 0
      %s226 = sadd.s32 %s225, 1
      %s227 = scalar_select %p224, %s225, %s226
      %p230 = pneg %p224
      %p231 = scmp.eq.s32.totalorder %s16, 3
      %p232 = por %p230, %p231
      %p233 = scmp.ne.s32.totalorder %s225, %s228
      %p234 = scmp.eq.s32.totalorder %s16, 0
      %p235 = por %p233, %p234
      %p236 = scmp.ne.s32.totalorder %s225, %s228
      %p237 = scmp.eq.s32.totalorder %s21, 3
      %p238 = por %p236, %p237
      %p239 = scmp.ne.s32.totalorder %s228, %s229
      %p240 = scmp.eq.s32.totalorder %s21, 0
      %p241 = por %p239, %p240
      %p242 = scmp.ne.s32.totalorder %s228, %s229
      %p243 = scmp.eq.s32.totalorder %s22, 3
      %p244 = por %p242, %p243
      %p246 = scmp.ne.s32.totalorder %s229, %s245
      %p247 = scmp.eq.s32.totalorder %s22, 0
      %p248 = por %p246, %p247
      %p249 = scmp.le.s32.totalorder 1, %s16
      %p250 = scmp.lt.s32.totalorder %s16, 5
      %p251 = pnand %p249, %p250
      %p252 = pneg %p251
      // Predicated region
      $region9: #{q_model.1} parent=5 // pred_check
        _
      $region10: #{q_model.1} parent=5 // pred_check_branch
        %254 = sbr.rel (%p251) target = $region12
      $region11: #{q_model.1} parent=5 // pred_region
        %s255 = ssub.s32 %s16, 1
        // Predicated region
        $region13: #{q_model.1} parent=11 // pred_check
          %p256 = pneg %p37
        $region14: #{q_model.1} parent=11 // pred_check_branch
          %258 = sbr.rel (%p256) target = $region16
        $region15: #{q_model.1} parent=11 // pred_region
          %s260 = ssub.s32 16, 16
          %261 = vsyncadd [#allocation3], %s260
          %s263 = sshll.u32 %s0, 4
          %s264 = int_to_ptr.vmem [resolvable:$true] %s263
          %266 = dma.vmem_to_smem %s264, 16, [#allocation2], [#allocation3]
        $region16: #{q_model.1} parent=11 // pred_fallthru
          _
        // Predicated region
        $region17: #{q_model.1} parent=11 // pred_check
          %p267 = pneg %p110
        $region18: #{q_model.1} parent=11 // pred_check_branch
          %269 = sbr.rel (%p267) target = $region20
        $region19: #{q_model.1} parent=11 // pred_region
          _
        $region20: #{q_model.1} parent=11 // pred_fallthru
          _
        // Predicated region
        $region21: #{q_model.1} parent=11 // pred_check
          %p270 = pneg %p131
        $region22: #{q_model.1} parent=11 // pred_check_branch
          %272 = sbr.rel (%p270) target = $region24
        $region23: #{q_model.1} parent=11 // pred_region
          _
        $region24: #{q_model.1} parent=11 // pred_fallthru
          _
        // Predicated region
        $region25: #{q_model.1} parent=11 // pred_check
          %p273 = pneg %p152
        $region26: #{q_model.1} parent=11 // pred_check_branch
          %275 = sbr.rel (%p273) target = $region28
        $region27: #{q_model.1} parent=11 // pred_region
          _
        $region28: #{q_model.1} parent=11 // pred_fallthru
          _
        // Predicated region
        $region29: #{q_model.1} parent=11 // pred_check
          %p276 = pneg %p173
        $region30: #{q_model.1} parent=11 // pred_check_branch
          %278 = sbr.rel (%p276) target = $region32
        $region31: #{q_model.1} parent=11 // pred_region
          _
        $region32: #{q_model.1} parent=11 // pred_fallthru
          _
        // Predicated region
        $region33: #{q_model.1} parent=11 // pred_check
          %p279 = pneg %p194
        $region34: #{q_model.1} parent=11 // pred_check_branch
          %281 = sbr.rel (%p279) target = $region36
        $region35: #{q_model.1} parent=11 // pred_region
          _
        $region36: #{q_model.1} parent=11 // pred_fallthru
          _
        // Predicated region
        $region37: #{q_model.1} parent=11 // pred_check
          %p282 = pneg %p215
        $region38: #{q_model.1} parent=11 // pred_check_branch
          %284 = sbr.rel (%p282) target = $region40
        $region39: #{q_model.1} parent=11 // pred_region
          _
        $region40: #{q_model.1} parent=11 // pred_fallthru
          _
      $region12: #{q_model.1} parent=5 // pred_fallthru
        _
      %p285 = scmp.lt.s32.totalorder %s16, 4
      // Predicated region
      $region41: #{q_model.1} parent=5 // pred_check
        %p286 = pneg %p285
      $region42: #{q_model.1} parent=5 // pred_check_branch
        %288 = sbr.rel (%p286) target = $region44
      $region43: #{q_model.1} parent=5 // pred_region
        // Predicated region
        $region45: #{q_model.1} parent=43 // pred_check
          %p289 = pneg %p57
        $region46: #{q_model.1} parent=43 // pred_check_branch
          %291 = sbr.rel (%p289) target = $region48
        $region47: #{q_model.1} parent=43 // pred_region
          %s292 = sand.u32 %s47, 1
          %s293 = sand.u32 %s47, 1
          %s294 = smul.addr %s293, 32
          %s295 = scalar_lea.vmem [#allocation4], %s294
          %s296 = smul.u32 2, %s16
          %s297 = smul.addr %s296, 4
          %s298 = scalar_lea.vmem %s1, %s297
          // Predicated region
          $region49: #{q_model.1} parent=47 // pred_check
            _
          $region50: #{q_model.1} parent=47 // pred_check_branch
            %300 = sbr.rel (0) target = $region52
          $region51: #{q_model.1} parent=47 // pred_region
            // Predicated region
            $region53: #{q_model.1} parent=51 // pred_check
              _
            $region54: #{q_model.1} parent=51 // pred_check_branch
              %302 = sbr.rel (0) target = $region56
            $region55: #{q_model.1} parent=51 // pred_region
              // Predicated region
              $region68: #{q_model.1} parent=55 // pred_check
                _
              $region69: #{q_model.1} parent=55 // pred_check_branch
                %323 = sbr.rel (0) target = $region71
              $region70: #{q_model.1} parent=55 // pred_region
                loop: start=0, step=1, limit=1
                $region72: #{q_model.1} parent=70 // loop_pre_header
                  _
                $region73: #{q_model.1} parent=70 // loop_header
                  %s325 = sphi 0, %s329
                  %p326 = scmp.ge.s32.totalorder %s325, 1
                  %s330 = sphi %s298, %s298
                  %s331 = sphi %s295, %s295
                $region74: #{q_model.1} parent=70 // loop_header_branch
                  %328 = sbr.rel (%p326) target = $region78
                $region75: #{q_model.1} parent=70 // loop_body
                  %v332 = vld [vmem:[%s330] sm:$0xff]
                  %333 = vst [vmem:[%s331] sm:$0xff] %v332
                  %v334 = vld [vmem:[%s330 + $0x20] sm:$0xff]
                  %335 = vst [vmem:[%s331 + $0x8] sm:$0xff] %v334
                  %v336 = vld [vmem:[%s330 + $0x40] sm:$0xff]
                  %337 = vst [vmem:[%s331 + $0x10] sm:$0xff] %v336
                  %v338 = vld [vmem:[%s330 + $0x60] sm:$0xff]
                  %339 = vst [vmem:[%s331 + $0x18] sm:$0xff] %v338
                $region76: #{q_model.1} parent=70 // loop_footer
                  %s329 = sadd.s32 1, %s325
                $region77: #{q_model.1} parent=70 // loop_footer_branch
                  %324 = sbr.rel target = $region73
                $region78: #{q_model.1} parent=70 // loop_exit
                  _
              $region71: #{q_model.1} parent=55 // pred_fallthru
                _
              // Predicated region
              $region79: #{q_model.1} parent=55 // pred_check
                _
              $region80: #{q_model.1} parent=55 // pred_check_branch
                %341 = sbr.rel target = $region82
              $region81: #{q_model.1} parent=55 // pred_region
                _
              $region82: #{q_model.1} parent=55 // pred_fallthru
                _
            $region56: #{q_model.1} parent=51 // pred_fallthru
              _
            // Predicated region
            $region57: #{q_model.1} parent=51 // pred_check
              _
            $region58: #{q_model.1} parent=51 // pred_check_branch
              %304 = sbr.rel target = $region60
            $region59: #{q_model.1} parent=51 // pred_region
              loop: start=0, step=1, limit=1
              $region61: #{q_model.1} parent=59 // loop_pre_header
                _
              $region62: #{q_model.1} parent=59 // loop_header
                %s307 = sphi 0, %s311
                %p308 = scmp.ge.s32.totalorder %s307, 1
                %s312 = sphi %s298, %s298
                %s313 = sphi %s295, %s295
              $region63: #{q_model.1} parent=59 // loop_header_branch
                %310 = sbr.rel (%p308) target = $region67
              $region64: #{q_model.1} parent=59 // loop_body
                %v314 = vld [vmem:[%s312] sm:$0xff]
                %315 = vst [vmem:[%s313] sm:$0xff] %v314
                %v316 = vld [vmem:[%s312 + $0x20] sm:$0xff]
                %317 = vst [vmem:[%s313 + $0x8] sm:$0xff] %v316
                %v318 = vld [vmem:[%s312 + $0x40] sm:$0xff]
                %319 = vst [vmem:[%s313 + $0x10] sm:$0xff] %v318
                %v320 = vld [vmem:[%s312 + $0x60] sm:$0xff]
                %321 = vst [vmem:[%s313 + $0x18] sm:$0xff] %v320
              $region65: #{q_model.1} parent=59 // loop_footer
                %s311 = sadd.s32 1, %s307
              $region66: #{q_model.1} parent=59 // loop_footer_branch
                %306 = sbr.rel target = $region62
              $region67: #{q_model.1} parent=59 // loop_exit
                _
            $region60: #{q_model.1} parent=51 // pred_fallthru
              _
          $region52: #{q_model.1} parent=47 // pred_fallthru
            _
          %342 = vnop
        $region48: #{q_model.1} parent=43 // pred_fallthru
          _
        // Predicated region
        $region83: #{q_model.1} parent=43 // pred_check
          %p343 = pneg %p83
        $region84: #{q_model.1} parent=43 // pred_check_branch
          %345 = sbr.rel (%p343) target = $region86
        $region85: #{q_model.1} parent=43 // pred_region
          %s346 = sand.u32 %s73, 1
          %s347 = sand.u32 %s73, 1
          %s348 = smul.addr %s347, 32
          %s349 = scalar_lea.vmem [#allocation5], %s348
          %s350 = smul.u32 2, %s16
          %s351 = smul.addr %s350, 4
          %s352 = scalar_lea.vmem %s2, %s351
          // Predicated region
          $region87: #{q_model.1} parent=85 // pred_check
            _
          $region88: #{q_model.1} parent=85 // pred_check_branch
            %354 = sbr.rel (0) target = $region90
          $region89: #{q_model.1} parent=85 // pred_region
            // Predicated region
            $region91: #{q_model.1} parent=89 // pred_check
              _
            $region92: #{q_model.1} parent=89 // pred_check_branch
              %356 = sbr.rel (0) target = $region94
            $region93: #{q_model.1} parent=89 // pred_region
              // Predicated region
              $region106: #{q_model.1} parent=93 // pred_check
                _
              $region107: #{q_model.1} parent=93 // pred_check_branch
                %377 = sbr.rel (0) target = $region109
              $region108: #{q_model.1} parent=93 // pred_region
                loop: start=0, step=1, limit=1
                $region110: #{q_model.1} parent=108 // loop_pre_header
                  _
                $region111: #{q_model.1} parent=108 // loop_header
                  %s379 = sphi 0, %s383
                  %p380 = scmp.ge.s32.totalorder %s379, 1
                  %s384 = sphi %s352, %s352
                  %s385 = sphi %s349, %s349
                $region112: #{q_model.1} parent=108 // loop_header_branch
                  %382 = sbr.rel (%p380) target = $region116
                $region113: #{q_model.1} parent=108 // loop_body
                  %v386 = vld [vmem:[%s384] sm:$0xff]
                  %387 = vst [vmem:[%s385] sm:$0xff] %v386
                  %v388 = vld [vmem:[%s384 + $0x20] sm:$0xff]
                  %389 = vst [vmem:[%s385 + $0x8] sm:$0xff] %v388
                  %v390 = vld [vmem:[%s384 + $0x40] sm:$0xff]
                  %391 = vst [vmem:[%s385 + $0x10] sm:$0xff] %v390
                  %v392 = vld [vmem:[%s384 + $0x60] sm:$0xff]
                  %393 = vst [vmem:[%s385 + $0x18] sm:$0xff] %v392
                $region114: #{q_model.1} parent=108 // loop_footer
                  %s383 = sadd.s32 1, %s379
                $region115: #{q_model.1} parent=108 // loop_footer_branch
                  %378 = sbr.rel target = $region111
                $region116: #{q_model.1} parent=108 // loop_exit
                  _
              $region109: #{q_model.1} parent=93 // pred_fallthru
                _
              // Predicated region
              $region117: #{q_model.1} parent=93 // pred_check
                _
              $region118: #{q_model.1} parent=93 // pred_check_branch
                %395 = sbr.rel target = $region120
              $region119: #{q_model.1} parent=93 // pred_region
                _
              $region120: #{q_model.1} parent=93 // pred_fallthru
                _
            $region94: #{q_model.1} parent=89 // pred_fallthru
              _
            // Predicated region
            $region95: #{q_model.1} parent=89 // pred_check
              _
            $region96: #{q_model.1} parent=89 // pred_check_branch
              %358 = sbr.rel target = $region98
            $region97: #{q_model.1} parent=89 // pred_region
              loop: start=0, step=1, limit=1
              $region99: #{q_model.1} parent=97 // loop_pre_header
                _
              $region100: #{q_model.1} parent=97 // loop_header
                %s361 = sphi 0, %s365
                %p362 = scmp.ge.s32.totalorder %s361, 1
                %s366 = sphi %s352, %s352
                %s367 = sphi %s349, %s349
              $region101: #{q_model.1} parent=97 // loop_header_branch
                %364 = sbr.rel (%p362) target = $region105
              $region102: #{q_model.1} parent=97 // loop_body
                %v368 = vld [vmem:[%s366] sm:$0xff]
                %369 = vst [vmem:[%s367] sm:$0xff] %v368
                %v370 = vld [vmem:[%s366 + $0x20] sm:$0xff]
                %371 = vst [vmem:[%s367 + $0x8] sm:$0xff] %v370
                %v372 = vld [vmem:[%s366 + $0x40] sm:$0xff]
                %373 = vst [vmem:[%s367 + $0x10] sm:$0xff] %v372
                %v374 = vld [vmem:[%s366 + $0x60] sm:$0xff]
                %375 = vst [vmem:[%s367 + $0x18] sm:$0xff] %v374
              $region103: #{q_model.1} parent=97 // loop_footer
                %s365 = sadd.s32 1, %s361
              $region104: #{q_model.1} parent=97 // loop_footer_branch
                %360 = sbr.rel target = $region100
              $region105: #{q_model.1} parent=97 // loop_exit
                _
            $region98: #{q_model.1} parent=89 // pred_fallthru
              _
          $region90: #{q_model.1} parent=85 // pred_fallthru
            _
          %396 = vnop
        $region86: #{q_model.1} parent=43 // pred_fallthru
          _
      $region44: #{q_model.1} parent=5 // pred_fallthru
        _
      %p397 = scmp.le.s32.totalorder 1, %s16
      %p398 = scmp.lt.s32.totalorder %s16, 5
      %p399 = pnand %p397, %p398
      %p400 = pneg %p399
      // Predicated region
      $region121: #{q_model.1} parent=5 // pred_check
        _
      $region122: #{q_model.1} parent=5 // pred_check_branch
        %402 = sbr.rel (%p399) target = $region124
      $region123: #{q_model.1} parent=5 // pred_region
        %s403 = ssub.s32 %s16, 1
        // Predicated region
        $region125: #{q_model.1} parent=123 // pred_check
          %p404 = pneg %p37
        $region126: #{q_model.1} parent=123 // pred_check_branch
          %406 = sbr.rel (%p404) target = $region128
        $region127: #{q_model.1} parent=123 // pred_region
          %407 = dma.done [#allocation3], 16
        $region128: #{q_model.1} parent=123 // pred_fallthru
          _
        %s408 = sand.u32 %s50, 1
        %s409 = sand.u32 %s50, 1
        %s410 = smul.addr %s409, 32
        %s411 = scalar_lea.vmem [#allocation4], %s410
        // Predicated region
        $region129: #{q_model.1} parent=123 // pred_check
          %p412 = pneg %p63
        $region130: #{q_model.1} parent=123 // pred_check_branch
          %414 = sbr.rel (%p412) target = $region132
        $region131: #{q_model.1} parent=123 // pred_region
          _
        $region132: #{q_model.1} parent=123 // pred_fallthru
          _
        %s415 = sand.u32 %s76, 1
        %s416 = sand.u32 %s76, 1
        %s417 = smul.addr %s416, 32
        %s418 = scalar_lea.vmem [#allocation5], %s417
        // Predicated region
        $region133: #{q_model.1} parent=123 // pred_check
          %p419 = pneg %p89
        $region134: #{q_model.1} parent=123 // pred_check_branch
          %421 = sbr.rel (%p419) target = $region136
        $region135: #{q_model.1} parent=123 // pred_region
          _
        $region136: #{q_model.1} parent=123 // pred_fallthru
          _
        %422 = sfence
        %p423 = pneg %p37
        %p424 = pneg %p34
        %s425 = sand.u32 %s50, 1
        %s426 = sand.u32 %s50, 1
        %s427 = smul.addr %s426, 32
        %s428 = scalar_lea.vmem [#allocation4], %s427
        %p429 = pneg %p63
        %p430 = pneg %p60
        %s431 = sand.u32 %s76, 1
        %s432 = sand.u32 %s76, 1
        %s433 = smul.addr %s432, 32
        %s434 = scalar_lea.vmem [#allocation5], %s433
        %p435 = pneg %p89
        %p436 = pneg %p86
        %p437 = pneg %p110
        %p438 = pneg %p107
        %p439 = pneg %p131
        %p440 = pneg %p128
        %p441 = pneg %p152
        %p442 = pneg %p149
        %p443 = pneg %p173
        %p444 = pneg %p170
        %p445 = pneg %p194
        %p446 = pneg %p191
        %p447 = pneg %p215
        %p448 = pneg %p212
        %p449 = pneg %p241
        %p450 = pneg %p238
        %s451 = smul.u32 2, %s21
        %p452 = scmp.lt.s32.totalorder %s451, 7
        %s453 = scalar_select %p452, %s451, 7
        %s454 = scalar_lea.vmem %s9, %s453
        %s455 = smul.u32 2, %s21
        %s456 = smul.u32 2, %s21
        %s457 = smul.u32 2, %s21
        %p458 = scmp.lt.s32.totalorder %s457, 7
        %s459 = scalar_select %p458, %s457, 7
        %s460 = scalar_lea.vmem %s9, %s459
        %s461 = smul.u32 2, %s21
        %v463 = vld [vmem:[%s3] sm:$0xf]
        %v464 = vld [vmem:[%s3 + $0x4] sm:$0xf]
        %v465 = vld [vmem:[%s3 + $0x8] sm:$0xf]
        %v466 = vld [vmem:[%s3 + $0xc] sm:$0xf]
        %v467 = vld [vmem:[%s3 + $0x10] sm:$0xf]
        %v468 = vld [vmem:[%s3 + $0x14] sm:$0xf]
        %v469 = vld [vmem:[%s3 + $0x18] sm:$0xf]
        %v470 = vld [vmem:[%s3 + $0x1c] sm:$0xf]
        %v471 = vld [vmem:[%s411] sm:$0xff]
        %v472 = vld [vmem:[%s411 + $0x8] sm:$0xff]
        %v473 = vld [vmem:[%s411 + $0x10] sm:$0xff]
        %v474 = vld [vmem:[%s411 + $0x18] sm:$0xff]
        %v475 = vld [vmem:[%s4] sm:$0xff]
        %v476 = vld [vmem:[%s4 + $0x8] sm:$0xff]
        %v477 = vld [vmem:[%s4 + $0x10] sm:$0xff]
        %v478 = vld [vmem:[%s4 + $0x18] sm:$0xff]
        %v479 = vld [vmem:[%s4 + $0x20] sm:$0xff]
        %v480 = vld [vmem:[%s4 + $0x28] sm:$0xff]
        %v481 = vld [vmem:[%s4 + $0x30] sm:$0xff]
        %v482 = vld [vmem:[%s4 + $0x38] sm:$0xff]
        %484 = vset.pattern.permute.xlu0 0
        %485 = vperm.xlu0 %484, %v475
        %v486 = vpop.permute.xlu0 %485
        %489 = vset.pattern.permute.xlu0 0
        %490 = vperm.xlu0 %489, %v476
        %v491 = vpop.permute.xlu0 %490
        %494 = vset.pattern.permute.xlu0 0
        %495 = vperm.xlu0 %494, %v477
        %v496 = vpop.permute.xlu0 %495
        %499 = vset.pattern.permute.xlu0 0
        %500 = vperm.xlu0 %499, %v478
        %v501 = vpop.permute.xlu0 %500
        %504 = vset.pattern.permute.xlu0 0
        %505 = vperm.xlu0 %504, %v479
        %v506 = vpop.permute.xlu0 %505
        %509 = vset.pattern.permute.xlu0 0
        %510 = vperm.xlu0 %509, %v480
        %v511 = vpop.permute.xlu0 %510
        %514 = vset.pattern.permute.xlu0 0
        %515 = vperm.xlu0 %514, %v481
        %v516 = vpop.permute.xlu0 %515
        %519 = vset.pattern.permute.xlu0 0
        %520 = vperm.xlu0 %519, %v482
        %v521 = vpop.permute.xlu0 %520
        %v531 = vunpack.c.l.b16 %v463
        %v532 = vunpack.c.l.b16 %v464
        %v533 = vunpack.c.l.b16 %v465
        %v534 = vunpack.c.l.b16 %v466
        %v535 = vunpack.c.l.b16 %v467
        %v536 = vunpack.c.l.b16 %v468
        %v537 = vunpack.c.l.b16 %v469
        %v538 = vunpack.c.l.b16 %v470
        %v539 = vpack.c.b16 %v532, %v531
        %v540 = vpack.c.b16 %v534, %v533
        %v541 = vpack.c.b16 %v536, %v535
        %v542 = vpack.c.b16 %v538, %v537
        %v547 = vunpack.c.l.b16 %v471
        %v548 = vunpack.c.h.b16 %v471
        %v549 = vunpack.c.l.b16 %v472
        %v550 = vunpack.c.h.b16 %v472
        %v551 = vunpack.c.l.b16 %v473
        %v552 = vunpack.c.h.b16 %v473
        %v553 = vunpack.c.l.b16 %v474
        %v554 = vunpack.c.h.b16 %v474
        %v555 = vpack.c.b16 %v549, %v547
        %v556 = vpack.c.b16 %v550, %v548
        %v557 = vpack.c.b16 %v553, %v551
        %v558 = vpack.c.b16 %v554, %v552
        %vm563 = vcmask 261120
        %v565 = vsel %vm563, %v539, 0
        %v568 = vsel %vm563, %v540, 0
        %v571 = vsel %vm563, %v541, 0
        %v574 = vsel %vm563, %v542, 0
        %576 = vmatprep.subr.bf16.mxu0 %v556
        %577 = vmatpush1.bf16.msra.mxu0 %v555
        %578 = vmatprep.subr.bf16.mxu0 %v558
        %579 = vmatpush1.bf16.msra.mxu0 %v557
        %580 = vmatprep.subr.bf16.mxu0 0
        %581 = vmatpush1.bf16.msra.mxu0 0
        %582 = vmatprep.subr.bf16.mxu0 0
        %583 = vmatpush1.bf16.msra.mxu0 0
        %584 = vmatprep.subr.bf16.mxu0 0
        %585 = vmatpush1.bf16.msra.mxu0 0
        %586 = vmatprep.subr.bf16.mxu0 0
        %587 = vmatpush1.bf16.msra.mxu0 0
        %588 = vmatprep.subr.bf16.mxu0 0
        %589 = vmatpush1.bf16.msra.mxu0 0
        %590 = vmatprep.subr.bf16.mxu0 0
        %591 = vmatpush1.bf16.msra.mxu0 0
        %592 = vmatprep.subr.bf16.mxu0 0
        %593 = vmatpush1.bf16.msra.mxu0 0
        %594 = vmatprep.subr.bf16.mxu0 0
        %595 = vmatpush1.bf16.msra.mxu0 0
        %596 = vmatprep.subr.bf16.mxu0 0
        %597 = vmatpush1.bf16.msra.mxu0 0
        %598 = vmatprep.subr.bf16.mxu0 0
        %599 = vmatpush1.bf16.msra.mxu0 0
        %600 = vmatprep.subr.bf16.mxu0 0
        %601 = vmatpush1.bf16.msra.mxu0 0
        %602 = vmatprep.subr.bf16.mxu0 0
        %603 = vmatpush1.bf16.msra.mxu0 0
        %604 = vmatprep.subr.bf16.mxu0 0
        %605 = vmatpush1.bf16.msra.mxu0 0
        %606 = vmatprep.subr.bf16.mxu0 0
        %607 = vmatpush1.bf16.msra.mxu0 0
        %608 = vmatprep.mubr.bf16.mxu0 0
        %609 = vmatmul.mubr.bf16.gmra.mrb[0].mxu0 %v565
        %v610 = vpop.f32.mrb[0].mxu0
        %v611 = vadd.f32 %v486, %v610
        %v612 = vpop.f32.mrb[0].mxu0
        %v613 = vadd.f32 %v486, %v612
        %v614 = vpop.f32.mrb[0].mxu0
        %v615 = vadd.f32 %v491, %v614
        %v616 = vpop.f32.mrb[0].mxu0
        %v617 = vadd.f32 %v491, %v616
        %618 = vmatprep.mubr.bf16.mxu0 0
        %619 = vmatmul.mubr.bf16.gmra.mrb[0].mxu0 %v568
        %v620 = vpop.f32.mrb[0].mxu0
        %v621 = vadd.f32 %v496, %v620
        %v622 = vpop.f32.mrb[0].mxu0
        %v623 = vadd.f32 %v496, %v622
        %v624 = vpop.f32.mrb[0].mxu0
        %v625 = vadd.f32 %v501, %v624
        %v626 = vpop.f32.mrb[0].mxu0
        %v627 = vadd.f32 %v501, %v626
        %628 = vmatprep.mubr.bf16.mxu0 0
        %629 = vmatmul.mubr.bf16.gmra.mrb[0].mxu0 %v571
        %v630 = vpop.f32.mrb[0].mxu0
        %v631 = vadd.f32 %v506, %v630
        %v632 = vpop.f32.mrb[0].mxu0
        %v633 = vadd.f32 %v506, %v632
        %v634 = vpop.f32.mrb[0].mxu0
        %v635 = vadd.f32 %v511, %v634
        %v636 = vpop.f32.mrb[0].mxu0
        %v637 = vadd.f32 %v511, %v636
        %638 = vmatprep.mubr.bf16.mxu0 0
        %639 = vmatmul.mubr.bf16.gmra.mrb[0].mxu0 %v574
        %v640 = vpop.f32.mrb[0].mxu0
        %v641 = vadd.f32 %v516, %v640
        %v642 = vpop.f32.mrb[0].mxu0
        %v643 = vadd.f32 %v516, %v642
        %v644 = vpop.f32.mrb[0].mxu0
        %v645 = vadd.f32 %v521, %v644
        %v646 = vpop.f32.mrb[0].mxu0
        %v647 = vadd.f32 %v521, %v646
        %648 = vdwg.mxu0
        %v649 = vmax.f32 %v611, 0.0
        %v650 = vmax.f32 %v613, 0.0
        %v651 = vmax.f32 %v615, 0.0
        %v652 = vmax.f32 %v617, 0.0
        %v653 = vmax.f32 %v621, 0.0
        %v654 = vmax.f32 %v623, 0.0
        %v655 = vmax.f32 %v625, 0.0
        %v656 = vmax.f32 %v627, 0.0
        %v657 = vmax.f32 %v631, 0.0
        %v658 = vmax.f32 %v633, 0.0
        %v659 = vmax.f32 %v635, 0.0
        %v660 = vmax.f32 %v637, 0.0
        %v661 = vmax.f32 %v641, 0.0
        %v662 = vmax.f32 %v643, 0.0
        %v663 = vmax.f32 %v645, 0.0
        %v664 = vmax.f32 %v647, 0.0
        %v665 = vld [vmem:[%s5] sm:$0xff]
        %v666 = vld [vmem:[%s5 + $0x8] sm:$0xff]
        %v667 = vld [vmem:[%s5 + $0x10] sm:$0xff]
        %v668 = vld [vmem:[%s5 + $0x18] sm:$0xff]
        %v669 = vld [vmem:[%s5 + $0x20] sm:$0xff]
        %v670 = vld [vmem:[%s5 + $0x28] sm:$0xff]
        %v671 = vld [vmem:[%s5 + $0x30] sm:$0xff]
        %v672 = vld [vmem:[%s5 + $0x38] sm:$0xff]
        %674 = vset.pattern.permute.xlu0 0
        %675 = vperm.xlu0 %674, %v665
        %v676 = vpop.permute.xlu0 %675
        %679 = vset.pattern.permute.xlu0 0
        %680 = vperm.xlu0 %679, %v666
        %v681 = vpop.permute.xlu0 %680
        %684 = vset.pattern.permute.xlu0 0
        %685 = vperm.xlu0 %684, %v667
        %v686 = vpop.permute.xlu0 %685
        %689 = vset.pattern.permute.xlu0 0
        %690 = vperm.xlu0 %689, %v668
        %v691 = vpop.permute.xlu0 %690
        %694 = vset.pattern.permute.xlu0 0
        %695 = vperm.xlu0 %694, %v669
        %v696 = vpop.permute.xlu0 %695
        %699 = vset.pattern.permute.xlu0 0
        %700 = vperm.xlu0 %699, %v670
        %v701 = vpop.permute.xlu0 %700
        %704 = vset.pattern.permute.xlu0 0
        %705 = vperm.xlu0 %704, %v671
        %v706 = vpop.permute.xlu0 %705
        %709 = vset.pattern.permute.xlu0 0
        %710 = vperm.xlu0 %709, %v672
        %v711 = vpop.permute.xlu0 %710
        %v713 = vmul.f32 %v649, %v676
        %v714 = vmul.f32 %v650, %v676
        %v715 = vmul.f32 %v651, %v681
        %v716 = vmul.f32 %v652, %v681
        %v717 = vmul.f32 %v653, %v686
        %v718 = vmul.f32 %v654, %v686
        %v719 = vmul.f32 %v655, %v691
        %v720 = vmul.f32 %v656, %v691
        %v721 = vmul.f32 %v657, %v696
        %v722 = vmul.f32 %v658, %v696
        %v723 = vmul.f32 %v659, %v701
        %v724 = vmul.f32 %v660, %v701
        %v725 = vmul.f32 %v661, %v706
        %v726 = vmul.f32 %v662, %v706
        %v727 = vmul.f32 %v663, %v711
        %v728 = vmul.f32 %v664, %v711
        %v729 = vadd.f32 %v713, %v715
        %v730 = vadd.f32 %v729, %v717
        %v731 = vadd.f32 %v730, %v719
        %v732 = vadd.f32 %v731, %v721
        %v733 = vadd.f32 %v732, %v723
        %v734 = vadd.f32 %v733, %v725
        %v735 = vadd.f32 %v734, %v727
        %v736 = vrot.slane %v735, 4
        %v737 = vadd.f32 %v735, %v736
        %v738 = vrot.slane %v737, 2
        %v739 = vadd.f32 %v737, %v738
        %v740 = vrot.slane %v739, 1
        %v741 = vadd.f32 %v739, %v740
        %v742 = vadd.f32 %v714, %v716
        %v743 = vadd.f32 %v742, %v718
        %v744 = vadd.f32 %v743, %v720
        %v745 = vadd.f32 %v744, %v722
        %v746 = vadd.f32 %v745, %v724
        %v747 = vadd.f32 %v746, %v726
        %v748 = vadd.f32 %v747, %v728
        %v749 = vrot.slane %v748, 4
        %v750 = vadd.f32 %v748, %v749
        %v751 = vrot.slane %v750, 2
        %v752 = vadd.f32 %v750, %v751
        %v753 = vrot.slane %v752, 1
        %v754 = vadd.f32 %v752, %v753
        %s755 = sld [smem:[#allocation2]]
        %v756 = vstv %s755
        %v757 = vadd.f32 %v741, %v756
        %v758 = vadd.f32 %v754, %v756
        %v759 = vld [vmem:[%s6] sm:$0xf]
        %v760 = vld [vmem:[%s6 + $0x4] sm:$0xf]
        %v761 = vld [vmem:[%s6 + $0x8] sm:$0xf]
        %v762 = vld [vmem:[%s6 + $0xc] sm:$0xf]
        %v763 = vld [vmem:[%s6 + $0x10] sm:$0xf]
        %v764 = vld [vmem:[%s6 + $0x14] sm:$0xf]
        %v765 = vld [vmem:[%s6 + $0x18] sm:$0xf]
        %v766 = vld [vmem:[%s6 + $0x1c] sm:$0xf]
        %v767 = vld [vmem:[%s418] sm:$0xff]
        %v768 = vld [vmem:[%s418 + $0x8] sm:$0xff]
        %v769 = vld [vmem:[%s418 + $0x10] sm:$0xff]
        %v770 = vld [vmem:[%s418 + $0x18] sm:$0xff]
        %v771 = vld [vmem:[%s7] sm:$0xff]
        %v772 = vld [vmem:[%s7 + $0x8] sm:$0xff]
        %v773 = vld [vmem:[%s7 + $0x10] sm:$0xff]
        %v774 = vld [vmem:[%s7 + $0x18] sm:$0xff]
        %v775 = vld [vmem:[%s7 + $0x20] sm:$0xff]
        %v776 = vld [vmem:[%s7 + $0x28] sm:$0xff]
        %v777 = vld [vmem:[%s7 + $0x30] sm:$0xff]
        %v778 = vld [vmem:[%s7 + $0x38] sm:$0xff]
        %780 = vset.pattern.permute.xlu0 0
        %781 = vperm.xlu0 %780, %v771
        %v782 = vpop.permute.xlu0 %781
        %785 = vset.pattern.permute.xlu0 0
        %786 = vperm.xlu0 %785, %v772
        %v787 = vpop.permute.xlu0 %786
        %790 = vset.pattern.permute.xlu0 0
        %791 = vperm.xlu0 %790, %v773
        %v792 = vpop.permute.xlu0 %791
        %795 = vset.pattern.permute.xlu0 0
        %796 = vperm.xlu0 %795, %v774
        %v797 = vpop.permute.xlu0 %796
        %800 = vset.pattern.permute.xlu0 0
        %801 = vperm.xlu0 %800, %v775
        %v802 = vpop.permute.xlu0 %801
        %805 = vset.pattern.permute.xlu0 0
        %806 = vperm.xlu0 %805, %v776
        %v807 = vpop.permute.xlu0 %806
        %810 = vset.pattern.permute.xlu0 0
        %811 = vperm.xlu0 %810, %v777
        %v812 = vpop.permute.xlu0 %811
        %815 = vset.pattern.permute.xlu0 0
        %816 = vperm.xlu0 %815, %v778
        %v817 = vpop.permute.xlu0 %816
        %v827 = vunpack.c.l.b16 %v759
        %v828 = vunpack.c.l.b16 %v760
        %v829 = vunpack.c.l.b16 %v761
        %v830 = vunpack.c.l.b16 %v762
        %v831 = vunpack.c.l.b16 %v763
        %v832 = vunpack.c.l.b16 %v764
        %v833 = vunpack.c.l.b16 %v765
        %v834 = vunpack.c.l.b16 %v766
        %v835 = vpack.c.b16 %v828, %v827
        %v836 = vpack.c.b16 %v830, %v829
        %v837 = vpack.c.b16 %v832, %v831
        %v838 = vpack.c.b16 %v834, %v833
        %v843 = vunpack.c.l.b16 %v767
        %v844 = vunpack.c.h.b16 %v767
        %v845 = vunpack.c.l.b16 %v768
        %v846 = vunpack.c.h.b16 %v768
        %v847 = vunpack.c.l.b16 %v769
        %v848 = vunpack.c.h.b16 %v769
        %v849 = vunpack.c.l.b16 %v770
        %v850 = vunpack.c.h.b16 %v770
        %v851 = vpack.c.b16 %v845, %v843
        %v852 = vpack.c.b16 %v846, %v844
        %v853 = vpack.c.b16 %v849, %v847
        %v854 = vpack.c.b16 %v850, %v848
        %v860 = vsel %vm563, %v835, 0
        %v863 = vsel %vm563, %v836, 0
        %v866 = vsel %vm563, %v837, 0
        %v869 = vsel %vm563, %v838, 0
        %871 = vmatprep.subr.bf16.mxu0 %v852
        %872 = vmatpush1.bf16.msra.mxu0 %v851
        %873 = vmatprep.subr.bf16.mxu0 %v854
        %874 = vmatpush1.bf16.msra.mxu0 %v853
        %875 = vmatprep.subr.bf16.mxu0 0
        %876 = vmatpush1.bf16.msra.mxu0 0
        %877 = vmatprep.subr.bf16.mxu0 0
        %878 = vmatpush1.bf16.msra.mxu0 0
        %879 = vmatprep.subr.bf16.mxu0 0
        %880 = vmatpush1.bf16.msra.mxu0 0
        %881 = vmatprep.subr.bf16.mxu0 0
        %882 = vmatpush1.bf16.msra.mxu0 0
        %883 = vmatprep.subr.bf16.mxu0 0
        %884 = vmatpush1.bf16.msra.mxu0 0
        %885 = vmatprep.subr.bf16.mxu0 0
        %886 = vmatpush1.bf16.msra.mxu0 0
        %887 = vmatprep.subr.bf16.mxu0 0
        %888 = vmatpush1.bf16.msra.mxu0 0
        %889 = vmatprep.subr.bf16.mxu0 0
        %890 = vmatpush1.bf16.msra.mxu0 0
        %891 = vmatprep.subr.bf16.mxu0 0
        %892 = vmatpush1.bf16.msra.mxu0 0
        %893 = vmatprep.subr.bf16.mxu0 0
        %894 = vmatpush1.bf16.msra.mxu0 0
        %895 = vmatprep.subr.bf16.mxu0 0
        %896 = vmatpush1.bf16.msra.mxu0 0
        %897 = vmatprep.subr.bf16.mxu0 0
        %898 = vmatpush1.bf16.msra.mxu0 0
        %899 = vmatprep.subr.bf16.mxu0 0
        %900 = vmatpush1.bf16.msra.mxu0 0
        %901 = vmatprep.subr.bf16.mxu0 0
        %902 = vmatpush1.bf16.msra.mxu0 0
        %903 = vmatprep.mubr.bf16.mxu0 0
        %904 = vmatmul.mubr.bf16.gmra.mrb[0].mxu0 %v860
        %v905 = vpop.f32.mrb[0].mxu0
        %v906 = vadd.f32 %v782, %v905
        %v907 = vpop.f32.mrb[0].mxu0
        %v908 = vadd.f32 %v782, %v907
        %v909 = vpop.f32.mrb[0].mxu0
        %v910 = vadd.f32 %v787, %v909
        %v911 = vpop.f32.mrb[0].mxu0
        %v912 = vadd.f32 %v787, %v911
        %913 = vmatprep.mubr.bf16.mxu0 0
        %914 = vmatmul.mubr.bf16.gmra.mrb[0].mxu0 %v863
        %v915 = vpop.f32.mrb[0].mxu0
        %v916 = vadd.f32 %v792, %v915
        %v917 = vpop.f32.mrb[0].mxu0
        %v918 = vadd.f32 %v792, %v917
        %v919 = vpop.f32.mrb[0].mxu0
        %v920 = vadd.f32 %v797, %v919
        %v921 = vpop.f32.mrb[0].mxu0
        %v922 = vadd.f32 %v797, %v921
        %923 = vmatprep.mubr.bf16.mxu0 0
        %924 = vmatmul.mubr.bf16.gmra.mrb[0].mxu0 %v866
        %v925 = vpop.f32.mrb[0].mxu0
        %v926 = vadd.f32 %v802, %v925
        %v927 = vpop.f32.mrb[0].mxu0
        %v928 = vadd.f32 %v802, %v927
        %v929 = vpop.f32.mrb[0].mxu0
        %v930 = vadd.f32 %v807, %v929
        %v931 = vpop.f32.mrb[0].mxu0
        %v932 = vadd.f32 %v807, %v931
        %933 = vmatprep.mubr.bf16.mxu0 0
        %934 = vmatmul.mubr.bf16.gmra.mrb[0].mxu0 %v869
        %v935 = vpop.f32.mrb[0].mxu0
        %v936 = vadd.f32 %v812, %v935
        %v937 = vpop.f32.mrb[0].mxu0
        %v938 = vadd.f32 %v812, %v937
        %v939 = vpop.f32.mrb[0].mxu0
        %v940 = vadd.f32 %v817, %v939
        %v941 = vpop.f32.mrb[0].mxu0
        %v942 = vadd.f32 %v817, %v941
        %943 = vdwg.mxu0
        %v944 = vmax.f32 %v906, 0.0
        %v945 = vmax.f32 %v908, 0.0
        %v946 = vmax.f32 %v910, 0.0
        %v947 = vmax.f32 %v912, 0.0
        %v948 = vmax.f32 %v916, 0.0
        %v949 = vmax.f32 %v918, 0.0
        %v950 = vmax.f32 %v920, 0.0
        %v951 = vmax.f32 %v922, 0.0
        %v952 = vmax.f32 %v926, 0.0
        %v953 = vmax.f32 %v928, 0.0
        %v954 = vmax.f32 %v930, 0.0
        %v955 = vmax.f32 %v932, 0.0
        %v956 = vmax.f32 %v936, 0.0
        %v957 = vmax.f32 %v938, 0.0
        %v958 = vmax.f32 %v940, 0.0
        %v959 = vmax.f32 %v942, 0.0
        %v960 = vld [vmem:[%s8] sm:$0xff]
        %v961 = vld [vmem:[%s8 + $0x8] sm:$0xff]
        %v962 = vld [vmem:[%s8 + $0x10] sm:$0xff]
        %v963 = vld [vmem:[%s8 + $0x18] sm:$0xff]
        %v964 = vld [vmem:[%s8 + $0x20] sm:$0xff]
        %v965 = vld [vmem:[%s8 + $0x28] sm:$0xff]
        %v966 = vld [vmem:[%s8 + $0x30] sm:$0xff]
        %v967 = vld [vmem:[%s8 + $0x38] sm:$0xff]
        %969 = vset.pattern.permute.xlu0 0
        %970 = vperm.xlu0 %969, %v960
        %v971 = vpop.permute.xlu0 %970
        %974 = vset.pattern.permute.xlu0 0
        %975 = vperm.xlu0 %974, %v961
        %v976 = vpop.permute.xlu0 %975
        %979 = vset.pattern.permute.xlu0 0
        %980 = vperm.xlu0 %979, %v962
        %v981 = vpop.permute.xlu0 %980
        %984 = vset.pattern.permute.xlu0 0
        %985 = vperm.xlu0 %984, %v963
        %v986 = vpop.permute.xlu0 %985
        %989 = vset.pattern.permute.xlu0 0
        %990 = vperm.xlu0 %989, %v964
        %v991 = vpop.permute.xlu0 %990
        %994 = vset.pattern.permute.xlu0 0
        %995 = vperm.xlu0 %994, %v965
        %v996 = vpop.permute.xlu0 %995
        %999 = vset.pattern.permute.xlu0 0
        %1000 = vperm.xlu0 %999, %v966
        %v1001 = vpop.permute.xlu0 %1000
        %1004 = vset.pattern.permute.xlu0 0
        %1005 = vperm.xlu0 %1004, %v967
        %v1006 = vpop.permute.xlu0 %1005
        %v1008 = vmul.f32 %v944, %v971
        %v1009 = vmul.f32 %v945, %v971
        %v1010 = vmul.f32 %v946, %v976
        %v1011 = vmul.f32 %v947, %v976
        %v1012 = vmul.f32 %v948, %v981
        %v1013 = vmul.f32 %v949, %v981
        %v1014 = vmul.f32 %v950, %v986
        %v1015 = vmul.f32 %v951, %v986
        %v1016 = vmul.f32 %v952, %v991
        %v1017 = vmul.f32 %v953, %v991
        %v1018 = vmul.f32 %v954, %v996
        %v1019 = vmul.f32 %v955, %v996
        %v1020 = vmul.f32 %v956, %v1001
        %v1021 = vmul.f32 %v957, %v1001
        %v1022 = vmul.f32 %v958, %v1006
        %v1023 = vmul.f32 %v959, %v1006
        %v1024 = vadd.f32 %v1008, %v1010
        %v1025 = vadd.f32 %v1024, %v1012
        %v1026 = vadd.f32 %v1025, %v1014
        %v1027 = vadd.f32 %v1026, %v1016
        %v1028 = vadd.f32 %v1027, %v1018
        %v1029 = vadd.f32 %v1028, %v1020
        %v1030 = vadd.f32 %v1029, %v1022
        %v1031 = vrot.slane %v1030, 4
        %v1032 = vadd.f32 %v1030, %v1031
        %v1033 = vrot.slane %v1032, 2
        %v1034 = vadd.f32 %v1032, %v1033
        %v1035 = vrot.slane %v1034, 1
        %v1036 = vadd.f32 %v1034, %v1035
        %v1037 = vadd.f32 %v1009, %v1011
        %v1038 = vadd.f32 %v1037, %v1013
        %v1039 = vadd.f32 %v1038, %v1015
        %v1040 = vadd.f32 %v1039, %v1017
        %v1041 = vadd.f32 %v1040, %v1019
        %v1042 = vadd.f32 %v1041, %v1021
        %v1043 = vadd.f32 %v1042, %v1023
        %v1044 = vrot.slane %v1043, 4
        %v1045 = vadd.f32 %v1043, %v1044
        %v1046 = vrot.slane %v1045, 2
        %v1047 = vadd.f32 %v1045, %v1046
        %v1048 = vrot.slane %v1047, 1
        %v1049 = vadd.f32 %v1047, %v1048
        %s1050 = sld [smem:[#allocation2 + $0x1]]
        %v1051 = vstv %s1050
        %v1052 = vadd.f32 %v1036, %v1051
        %v1053 = vadd.f32 %v1049, %v1051
        %v1054 = vmin.f32 %v757, %v1052
        %v1055 = vmin.f32 %v758, %v1053
        %v1058 = vcombine.low %v1054, %v1055
        %v1060 = vunpack.c.l.s4 1966171168
        %v1061 = vunpack.c.0.s8 %v1060
        %v1062 = vlaneseq
        %v1063 = vshrl.u32 %v1062, 7
        %v1064 = vsub.s32 %v1061, %v1063
        %v1065 = vrot.slane %v1058, %v1064
        %v1067 = vunpack.c.l.s4 1966171168
        %v1068 = vunpack.c.0.s8 %v1067
        %v1069 = vlaneseq
        %v1070 = vshrl.u32 %v1069, 7
        %v1071 = vsub.s32 %v1068, %v1070
        %v1072 = vrot.slane %v1065, %v1071
        %v1074 = vlaneseq
        %vm1075 = vcmp.ge.s32.totalorder %v1074, 0
        %vm1076 = vcmp.lt.s32.totalorder %v1074, 256
        %vm1077 = vmand %vm1075, %vm1076
        %1078 = vst.msk [vmem:[%s460] sm:$0x3] %vm1077, %v1072
        %s1079 = smul.u32 2, %s21
        %p1080 = scmp.lt.s32.totalorder %s1079, 7
        %s1081 = scalar_select %p1080, %s1079, 7
        %s1082 = scalar_lea.vmem %s9, %s1081
        // Predicated region
        $region137: #{q_model.1} parent=123 // pred_check
          %p1083 = pneg %p238
        $region138: #{q_model.1} parent=123 // pred_check_branch
          %1085 = sbr.rel (%p1083) target = $region140
        $region139: #{q_model.1} parent=123 // pred_region
          %s1086 = smul.u32 2, %s21
        $region140: #{q_model.1} parent=123 // pred_fallthru
          _
      $region124: #{q_model.1} parent=5 // pred_fallthru
        _
      %p1087 = scmp.le.s32.totalorder 2, %s16
      // Predicated region
      $region141: #{q_model.1} parent=5 // pred_check
        %p1088 = pneg %p1087
      $region142: #{q_model.1} parent=5 // pred_check_branch
        %1090 = sbr.rel (%p1088) target = $region144
      $region143: #{q_model.1} parent=5 // pred_region
        %s1091 = ssub.s32 %s16, 2
        // Predicated region
        $region145: #{q_model.1} parent=143 // pred_check
          %p1092 = pneg %p244
        $region146: #{q_model.1} parent=143 // pred_check_branch
          %1094 = sbr.rel (%p1092) target = $region148
        $region147: #{q_model.1} parent=143 // pred_region
          %s1095 = smul.u32 2, %s22
          %p1096 = scmp.lt.s32.totalorder %s1095, 7
          %s1097 = scalar_select %p1096, %s1095, 7
          %s1098 = scalar_lea.vmem %s9, %s1097
        $region148: #{q_model.1} parent=143 // pred_fallthru
          _
      $region144: #{q_model.1} parent=5 // pred_fallthru
        _
    $region6: #{q_model.1} parent=1 // loop_footer
      %s20 = sadd.s32 1, %s16
    $region7: #{q_model.1} parent=1 // loop_footer_branch
      %15 = sbr.rel target = $region3
    $region8: #{q_model.1} parent=1 // loop_exit
      _
    %1099 = vsyncpa [#allocation3], 1
    %s1100 = scalar_lea.sflag [#allocation3], 1
    %1101 = vsyncpa %s1100, 1

</llo_original>
